<compile_context>
chip_gen: v7x
topology: tpu7x:2x2x1
jax: 0.10.0
libtpu: 0.0.40
codegen_flags: <defaults>
</compile_context>

<pallas_src>
import functools
import math

import jax
import jax.numpy as jnp
from jax.experimental import pallas as pl
from jax.experimental.pallas import tpu as pltpu

NEG_SLOPE = 0.01  # PyTorch nn.LeakyReLU default negative_slope


def _round_up(x, m):
    return ((x + m - 1) // m) * m


def _mlp_kernel(a_ref, s_ref, t_ref, w1a_ref, w1s_ref, w1t_ref,
                w23_ref, w4_ref, bias_ref, out_ref, *, h, op):
    """Fused 4-layer MLP (LeakyReLU x3, Tanh) + action rescaling.

    a_ref/s_ref/t_ref : (TB, 9/30/3) activation tiles (compute dtype), stream
    w1a/w1s/w1t       : row-splits of W1 (9/30/3, h), VMEM-resident
    w23_ref           : (h, 2h)  [W2 | W3] slab, resident
    w4_ref            : (h, op)  W4 padded to op lanes, resident
    bias_ref          : (1, 3h + 3op) f32 [b1|b2|b3|b4|center|range], resident
    out_ref           : (TB, op) f32 lane-dense output tile
    """
    cdt = w23_ref.dtype  # MXU operand dtype (bf16 by default, or f32)

    b1 = bias_ref[:, 0:h]
    b2 = bias_ref[:, h:2 * h]
    b3 = bias_ref[:, 2 * h:3 * h]
    b4 = bias_ref[:, 3 * h:3 * h + op]
    center = bias_ref[:, 3 * h + op:3 * h + 2 * op]
    arange = bias_ref[:, 3 * h + 2 * op:3 * h + 3 * op]

    def leaky(v):  # exact LeakyReLU for 0 < slope < 1: one vmax, no cmp+select
        return jnp.maximum(v, NEG_SLOPE * v)

    # Layer 1: x @ W1 == a @ W1a + s @ W1s + t @ W1t  (inputs already in cdt).
    z1 = (jnp.dot(a_ref[...], w1a_ref[...], preferred_element_type=jnp.float32)
          + jnp.dot(s_ref[...], w1s_ref[...], preferred_element_type=jnp.float32)
          + jnp.dot(t_ref[...], w1t_ref[...], preferred_element_type=jnp.float32)
          + b1)
    a1 = leaky(z1)
    a2 = leaky(jnp.dot(a1.astype(cdt), w23_ref[:, 0:h],
                       preferred_element_type=jnp.float32) + b2)
    a3 = leaky(jnp.dot(a2.astype(cdt), w23_ref[:, h:2 * h],
                       preferred_element_type=jnp.float32) + b3)
    tanh = jnp.tanh(jnp.dot(a3.astype(cdt), w4_ref[...],
                            preferred_element_type=jnp.float32) + b4)
    out_ref[...] = center + arange * tanh


def pack_params(params, compute_dtype=jnp.bfloat16, split_sizes=(9, 30, 3)):
    """One-time packing/padding of the module parameters (hoisted out of the
    per-call path).  compute_dtype is the MXU operand dtype (bf16 or f32)."""
    w1, b1, w2, b2, w3, b3, w4, b4, center, arange = params
    d_in, h = w1.shape            # (42, 256)
    n_out = w4.shape[1]           # 9
    op = _round_up(n_out, 128)    # 128

    na, ns, nt = split_sizes
    assert na + ns + nt == d_in

    w1a = w1[:na].astype(compute_dtype)               # (9, 256)
    w1s = w1[na:na + ns].astype(compute_dtype)        # (30, 256)
    w1t = w1[na + ns:].astype(compute_dtype)          # (3, 256)
    w23 = jnp.concatenate([w2, w3], axis=1).astype(compute_dtype)       # (256, 512)
    w4p = jnp.pad(w4, ((0, 0), (0, op - n_out))).astype(compute_dtype)  # (256, 128)

    b4p = jnp.pad(b4, ((0, 0), (0, op - n_out)))
    cenp = jnp.pad(center, ((0, 0), (0, op - n_out)))
    rngp = jnp.pad(arange, ((0, 0), (0, op - n_out)))
    bias = jnp.concatenate([b1, b2, b3, b4p, cenp, rngp],
                           axis=1).astype(jnp.float32)                  # (1, 1152)

    return (w1a, w1s, w1t, w23, w4p, bias)


@functools.partial(jax.jit, static_argnames=("n_out",))
def neural_ode_controller_forward(action, state, target, packed, n_out=9):
    """action: (B, 9), state: (B, 30), target: (B, 3) -> (B, 9) float32."""
    w1a, w1s, w1t, w23, w4p, bias = packed
    cdt = w23.dtype
    h = w23.shape[0]
    op = w4p.shape[1]

    B = action.shape[0]
    na, ns, nt = action.shape[1], state.shape[1], target.shape[1]

    # Stream x in the MXU operand dtype (cast in the wrapper, not in-kernel).
    a = action.astype(cdt)
    s = state.astype(cdt)
    t = target.astype(cdt)

    # Batch tiling: one full-extent block for small B; for larger B use tiles
    # of up to 512 rows (multiple of 128) capped so the grid has >= 2 steps
    # (megacore sharding on v7x).  No row padding: the last tile may be ragged.
    if B <= 128:
        tb = B
    else:
        tb = min(512, _round_up(pl.cdiv(B, 2), 128))
    grid = (pl.cdiv(B, tb),)

    kernel = functools.partial(_mlp_kernel, h=h, op=op)

    out = pl.pallas_call(
        kernel,
        out_shape=jax.ShapeDtypeStruct((B, op), jnp.float32),
        grid=grid,
        in_specs=[
            pl.BlockSpec((tb, na), lambda i: (i, 0)),     # action streams
            pl.BlockSpec((tb, ns), lambda i: (i, 0)),     # state streams
            pl.BlockSpec((tb, nt), lambda i: (i, 0)),     # target streams
            pl.BlockSpec(w1a.shape, lambda i: (0, 0)),    # weights resident
            pl.BlockSpec(w1s.shape, lambda i: (0, 0)),
            pl.BlockSpec(w1t.shape, lambda i: (0, 0)),
            pl.BlockSpec(w23.shape, lambda i: (0, 0)),
            pl.BlockSpec(w4p.shape, lambda i: (0, 0)),
            pl.BlockSpec(bias.shape, lambda i: (0, 0)),
        ],
        out_specs=pl.BlockSpec((tb, op), lambda i: (i, 0)),
        compiler_params=pltpu.CompilerParams(
            dimension_semantics=("parallel",)),
    )(a, s, t, w1a, w1s, w1t, w23, w4p, bias)

    return out[:, :n_out]


def init_params(key, number_of_segment=3, down_sample=10, target_pos_size=3):
    """Deterministic Xavier-normal weights / zero biases, as in the module."""
    d_in = number_of_segment * 3 + down_sample * 3 + target_pos_size  # 42
    dims = [d_in, 256, 256, 256, 9]
    keys = jax.random.split(key, len(dims) - 1)
    weights, biases = [], []
    for k, (fi, fo) in zip(keys, zip(dims[:-1], dims[1:])):
        std = math.sqrt(2.0 / (fi + fo))  # xavier_normal_, gain=1
        # stored as (in, out) so the kernel computes x @ W
        weights.append(jax.random.normal(k, (fi, fo), jnp.float32) * std)
        biases.append(jnp.zeros((1, fo), jnp.float32))

    min_av = jnp.array([-0.03, -0.015, -0.015, -0.03, -0.015, -0.015,
                        -0.03, -0.015, -0.015], jnp.float32)
    max_av = jnp.array([0.03, 0.015, 0.015, 0.03, 0.015, 0.015,
                        0.03, 0.015, 0.015], jnp.float32)
    action_range = ((max_av - min_av) / 2.0).reshape(1, 9)
    action_center = ((max_av + min_av) / 2.0).reshape(1, 9)

    return (weights[0], biases[0], weights[1], biases[1],
            weights[2], biases[2], weights[3], biases[3],
            action_center, action_range)


def _reference(action, state, target, params):
    """Plain-JAX reference of the PyTorch forward (f32)."""
    w1, b1, w2, b2, w3, b3, w4, b4, center, arange = params
    x = jnp.concatenate([action, state, target], axis=1).astype(jnp.float32)

    def leaky(v):
        return jnp.where(v > 0, v, NEG_SLOPE * v)

    h = leaky(x @ w1 + b1)
    h = leaky(h @ w2 + b2)
    h = leaky(h @ w3 + b3)
    t = jnp.tanh(h @ w4 + b4)
    return center + arange * t


if __name__ == "__main__":
    key = jax.random.PRNGKey(0)
    k_p, k_a, k_s, k_t = jax.random.split(key, 4)

    params = init_params(k_p)

    # --- small batch, exact-semantics (f32) path ---
    B = 2
    action = jax.random.normal(k_a, (B, 9), jnp.float32)    # number_of_segment * 3
    state = jax.random.normal(k_s, (B, 30), jnp.float32)    # down_sample * 3
    target = jax.random.normal(k_t, (B, 3), jnp.float32)    # target_pos_size

    ref = jax.block_until_ready(_reference(action, state, target, params))

    packed_f32 = pack_params(params, compute_dtype=jnp.float32)
    out = jax.block_until_ready(
        neural_ode_controller_forward(action, state, target, packed_f32))
    assert out.shape == (B, 9)
    assert jnp.allclose(out, ref, atol=1e-5, rtol=1e-5)

    # --- default bf16-operand fast path (full-rate MXU, half the weight DMA);
    #     outputs are tanh-bounded and scaled by <=0.03 so abs error stays tiny
    packed_bf16 = pack_params(params)  # bf16 default
    out_bf16 = jax.block_until_ready(
        neural_ode_controller_forward(action, state, target, packed_bf16))
    assert out_bf16.shape == (B, 9)
    assert jnp.allclose(out_bf16, ref, atol=5e-3, rtol=0)

    # --- larger batch: 2-step "parallel" grid (both TCs on v7x), ragged last
    #     tile handled by masked output stores, weights resident across steps
    B2 = 300
    a2 = jax.random.normal(k_a, (B2, 9), jnp.float32)
    s2 = jax.random.normal(k_s, (B2, 30), jnp.float32)
    t2 = jax.random.normal(k_t, (B2, 3), jnp.float32)
    ref2 = jax.block_until_ready(_reference(a2, s2, t2, params))

    out2 = jax.block_until_ready(
        neural_ode_controller_forward(a2, s2, t2, packed_f32))
    assert out2.shape == (B2, 9)
    assert jnp.allclose(out2, ref2, atol=1e-5, rtol=1e-5)

    out2_bf16 = jax.block_until_ready(
        neural_ode_controller_forward(a2, s2, t2, packed_bf16))
    assert jnp.allclose(out2_bf16, ref2, atol=5e-3, rtol=0)

    print("KERNEL_OK")
</pallas_src>

<mosaic_0001>
module attributes {stable_mosaic.version = 11 : i64} {
  func.func @_mlp_kernel(%arg0: i32, %arg1: memref<2x9xf32, #tpu.memory_space<vmem>>, %arg2: memref<2x30xf32, #tpu.memory_space<vmem>>, %arg3: memref<2x3xf32, #tpu.memory_space<vmem>>, %arg4: memref<9x256xf32, #tpu.memory_space<vmem>>, %arg5: memref<30x256xf32, #tpu.memory_space<vmem>>, %arg6: memref<3x256xf32, #tpu.memory_space<vmem>>, %arg7: memref<256x512xf32, #tpu.memory_space<vmem>>, %arg8: memref<256x128xf32, #tpu.memory_space<vmem>>, %arg9: memref<1x1152xf32, #tpu.memory_space<vmem>>, %arg10: memref<2x128xf32, #tpu.memory_space<vmem>>) attributes {dimension_semantics = [#tpu.dimension_semantics<parallel>], iteration_bounds = array<i64: 1>, scalar_prefetch = 0 : i64, scratch_operands = 0 : i64, tpu.core_type = #tpu.core_type<tc>, window_params = [{transform_indices = @transform_0, window_bounds = array<i64: 2, 9>}, {transform_indices = @transform_1, window_bounds = array<i64: 2, 30>}, {transform_indices = @transform_2, window_bounds = array<i64: 2, 3>}, {pipeline_mode = #tpu.pipeline_mode<synchronous>, transform_indices = @transform_3, window_bounds = array<i64: 9, 256>}, {pipeline_mode = #tpu.pipeline_mode<synchronous>, transform_indices = @transform_4, window_bounds = array<i64: 30, 256>}, {pipeline_mode = #tpu.pipeline_mode<synchronous>, transform_indices = @transform_5, window_bounds = array<i64: 3, 256>}, {pipeline_mode = #tpu.pipeline_mode<synchronous>, transform_indices = @transform_6, window_bounds = array<i64: 256, 512>}, {pipeline_mode = #tpu.pipeline_mode<synchronous>, transform_indices = @transform_7, window_bounds = array<i64: 256, 128>}, {pipeline_mode = #tpu.pipeline_mode<synchronous>, transform_indices = @transform_8, window_bounds = array<i64: 1, 1152>}, {transform_indices = @transform_9, window_bounds = array<i64: 2, 128>}]} {
    %c0 = arith.constant 0 : index
    %c0_0 = arith.constant 0 : index
    %0 = vector.load %arg9[%c0, %c0_0] : memref<1x1152xf32, #tpu.memory_space<vmem>>, vector<1x256xf32>
    %c0_1 = arith.constant 0 : index
    %c256 = arith.constant 256 : index
    %1 = vector.load %arg9[%c0_1, %c256] : memref<1x1152xf32, #tpu.memory_space<vmem>>, vector<1x256xf32>
    %c0_2 = arith.constant 0 : index
    %c512 = arith.constant 512 : index
    %2 = vector.load %arg9[%c0_2, %c512] : memref<1x1152xf32, #tpu.memory_space<vmem>>, vector<1x256xf32>
    %c0_3 = arith.constant 0 : index
    %c768 = arith.constant 768 : index
    %3 = vector.load %arg9[%c0_3, %c768] : memref<1x1152xf32, #tpu.memory_space<vmem>>, vector<1x128xf32>
    %c0_4 = arith.constant 0 : index
    %c896 = arith.constant 896 : index
    %4 = vector.load %arg9[%c0_4, %c896] : memref<1x1152xf32, #tpu.memory_space<vmem>>, vector<1x128xf32>
    %c0_5 = arith.constant 0 : index
    %c1024 = arith.constant 1024 : index
    %5 = vector.load %arg9[%c0_5, %c1024] : memref<1x1152xf32, #tpu.memory_space<vmem>>, vector<1x128xf32>
    %c0_6 = arith.constant 0 : index
    %c0_7 = arith.constant 0 : index
    %6 = vector.load %arg1[%c0_6, %c0_7] : memref<2x9xf32, #tpu.memory_space<vmem>>, vector<2x9xf32>
    %c0_8 = arith.constant 0 : index
    %c0_9 = arith.constant 0 : index
    %7 = vector.load %arg4[%c0_8, %c0_9] : memref<9x256xf32, #tpu.memory_space<vmem>>, vector<9x256xf32>
    %cst = arith.constant dense<0.000000e+00> : vector<2x256xf32>
    %8 = tpu.matmul %6, %7, %cst {dimension_numbers = #tpu.dot_dimension_numbers<[1], [0], [0], [1], [0, 0, 1, 1], [], []>} : vector<2x9xf32>, vector<9x256xf32>, vector<2x256xf32> -> vector<2x256xf32>
    %c0_10 = arith.constant 0 : index
    %c0_11 = arith.constant 0 : index
    %9 = vector.load %arg2[%c0_10, %c0_11] : memref<2x30xf32, #tpu.memory_space<vmem>>, vector<2x30xf32>
    %c0_12 = arith.constant 0 : index
    %c0_13 = arith.constant 0 : index
    %10 = vector.load %arg5[%c0_12, %c0_13] : memref<30x256xf32, #tpu.memory_space<vmem>>, vector<30x256xf32>
    %cst_14 = arith.constant dense<0.000000e+00> : vector<2x256xf32>
    %11 = tpu.matmul %9, %10, %cst_14 {dimension_numbers = #tpu.dot_dimension_numbers<[1], [0], [0], [1], [0, 0, 1, 1], [], []>} : vector<2x30xf32>, vector<30x256xf32>, vector<2x256xf32> -> vector<2x256xf32>
    %12 = arith.addf %8, %11 : vector<2x256xf32>
    %c0_15 = arith.constant 0 : index
    %c0_16 = arith.constant 0 : index
    %13 = vector.load %arg3[%c0_15, %c0_16] : memref<2x3xf32, #tpu.memory_space<vmem>>, vector<2x3xf32>
    %c0_17 = arith.constant 0 : index
    %c0_18 = arith.constant 0 : index
    %14 = vector.load %arg6[%c0_17, %c0_18] : memref<3x256xf32, #tpu.memory_space<vmem>>, vector<3x256xf32>
    %cst_19 = arith.constant dense<0.000000e+00> : vector<2x256xf32>
    %15 = tpu.matmul %13, %14, %cst_19 {dimension_numbers = #tpu.dot_dimension_numbers<[1], [0], [0], [1], [0, 0, 1, 1], [], []>} : vector<2x3xf32>, vector<3x256xf32>, vector<2x256xf32> -> vector<2x256xf32>
    %16 = arith.addf %12, %15 : vector<2x256xf32>
    %17 = vector.broadcast %0 : vector<1x256xf32> to vector<2x256xf32>
    %18 = arith.addf %16, %17 : vector<2x256xf32>
    %cst_20 = arith.constant 0.00999999977 : f32
    %19 = vector.broadcast %cst_20 : f32 to vector<2x256xf32>
    %20 = arith.mulf %19, %18 : vector<2x256xf32>
    %21 = arith.maximumf %18, %20 : vector<2x256xf32>
    %c0_21 = arith.constant 0 : index
    %c0_22 = arith.constant 0 : index
    %22 = vector.load %arg7[%c0_21, %c0_22] : memref<256x512xf32, #tpu.memory_space<vmem>>, vector<256x256xf32>
    %cst_23 = arith.constant dense<0.000000e+00> : vector<2x256xf32>
    %23 = tpu.matmul %21, %22, %cst_23 {dimension_numbers = #tpu.dot_dimension_numbers<[1], [0], [0], [1], [0, 0, 1, 1], [], []>} : vector<2x256xf32>, vector<256x256xf32>, vector<2x256xf32> -> vector<2x256xf32>
    %24 = vector.broadcast %1 : vector<1x256xf32> to vector<2x256xf32>
    %25 = arith.addf %23, %24 : vector<2x256xf32>
    %cst_24 = arith.constant 0.00999999977 : f32
    %26 = vector.broadcast %cst_24 : f32 to vector<2x256xf32>
    %27 = arith.mulf %26, %25 : vector<2x256xf32>
    %28 = arith.maximumf %25, %27 : vector<2x256xf32>
    %c0_25 = arith.constant 0 : index
    %c256_26 = arith.constant 256 : index
    %29 = vector.load %arg7[%c0_25, %c256_26] : memref<256x512xf32, #tpu.memory_space<vmem>>, vector<256x256xf32>
    %cst_27 = arith.constant dense<0.000000e+00> : vector<2x256xf32>
    %30 = tpu.matmul %28, %29, %cst_27 {dimension_numbers = #tpu.dot_dimension_numbers<[1], [0], [0], [1], [0, 0, 1, 1], [], []>} : vector<2x256xf32>, vector<256x256xf32>, vector<2x256xf32> -> vector<2x256xf32>
    %31 = vector.broadcast %2 : vector<1x256xf32> to vector<2x256xf32>
    %32 = arith.addf %30, %31 : vector<2x256xf32>
    %cst_28 = arith.constant 0.00999999977 : f32
    %33 = vector.broadcast %cst_28 : f32 to vector<2x256xf32>
    %34 = arith.mulf %33, %32 : vector<2x256xf32>
    %35 = arith.maximumf %32, %34 : vector<2x256xf32>
    %c0_29 = arith.constant 0 : index
    %c0_30 = arith.constant 0 : index
    %36 = vector.load %arg8[%c0_29, %c0_30] : memref<256x128xf32, #tpu.memory_space<vmem>>, vector<256x128xf32>
    %cst_31 = arith.constant dense<0.000000e+00> : vector<2x128xf32>
    %37 = tpu.matmul %35, %36, %cst_31 {dimension_numbers = #tpu.dot_dimension_numbers<[1], [0], [0], [1], [0, 0, 1, 1], [], []>} : vector<2x256xf32>, vector<256x128xf32>, vector<2x128xf32> -> vector<2x128xf32>
    %38 = vector.broadcast %3 : vector<1x128xf32> to vector<2x128xf32>
    %39 = arith.addf %37, %38 : vector<2x128xf32>
    %40 = math.tanh %39 : vector<2x128xf32>
    %41 = vector.broadcast %5 : vector<1x128xf32> to vector<2x128xf32>
    %42 = arith.mulf %41, %40 : vector<2x128xf32>
    %43 = vector.broadcast %4 : vector<1x128xf32> to vector<2x128xf32>
    %44 = arith.addf %43, %42 : vector<2x128xf32>
    %c0_32 = arith.constant 0 : index
    %c0_33 = arith.constant 0 : index
    %45 = vector.load %arg10[%c0_32, %c0_33] : memref<2x128xf32, #tpu.memory_space<vmem>>, vector<2x128xf32>
    tpu.vector_store %arg10[%c0_32, %c0_33], %44 {strides = array<i32>} : memref<2x128xf32, #tpu.memory_space<vmem>>, vector<2x128xf32>,
    return
  }
  func.func @transform_0(%arg0: i32) -> (i32, i32) {
    %c0_i32 = arith.constant 0 : i32
    %c0_i32_0 = arith.constant 0 : i32
    return %arg0, %c0_i32 : i32, i32
  }
  func.func @transform_1(%arg0: i32) -> (i32, i32) {
    %c0_i32 = arith.constant 0 : i32
    %c0_i32_0 = arith.constant 0 : i32
    return %arg0, %c0_i32 : i32, i32
  }
  func.func @transform_2(%arg0: i32) -> (i32, i32) {
    %c0_i32 = arith.constant 0 : i32
    %c0_i32_0 = arith.constant 0 : i32
    return %arg0, %c0_i32 : i32, i32
  }
  func.func @transform_3(%arg0: i32) -> (i32, i32) {
    %c0_i32 = arith.constant 0 : i32
    %c0_i32_0 = arith.constant 0 : i32
    %c0_i32_1 = arith.constant 0 : i32
    return %c0_i32, %c0_i32_0 : i32, i32
  }
  func.func @transform_4(%arg0: i32) -> (i32, i32) {
    %c0_i32 = arith.constant 0 : i32
    %c0_i32_0 = arith.constant 0 : i32
    %c0_i32_1 = arith.constant 0 : i32
    return %c0_i32, %c0_i32_0 : i32, i32
  }
  func.func @transform_5(%arg0: i32) -> (i32, i32) {
    %c0_i32 = arith.constant 0 : i32
    %c0_i32_0 = arith.constant 0 : i32
    %c0_i32_1 = arith.constant 0 : i32
    return %c0_i32, %c0_i32_0 : i32, i32
  }
  func.func @transform_6(%arg0: i32) -> (i32, i32) {
    %c0_i32 = arith.constant 0 : i32
    %c0_i32_0 = arith.constant 0 : i32
    %c0_i32_1 = arith.constant 0 : i32
    return %c0_i32, %c0_i32_0 : i32, i32
  }
  func.func @transform_7(%arg0: i32) -> (i32, i32) {
    %c0_i32 = arith.constant 0 : i32
    %c0_i32_0 = arith.constant 0 : i32
    %c0_i32_1 = arith.constant 0 : i32
    return %c0_i32, %c0_i32_0 : i32, i32
  }
  func.func @transform_8(%arg0: i32) -> (i32, i32) {
    %c0_i32 = arith.constant 0 : i32
    %c0_i32_0 = arith.constant 0 : i32
    %c0_i32_1 = arith.constant 0 : i32
    return %c0_i32, %c0_i32_0 : i32, i32
  }
  func.func @transform_9(%arg0: i32) -> (i32, i32) {
    %c0_i32 = arith.constant 0 : i32
    %c0_i32_0 = arith.constant 0 : i32
    return %arg0, %c0_i32 : i32, i32
  }
}

</mosaic_0001>

<llo_original>
// kernel: neural_ode_controller_forward.1
$region0: #{neural_ode_controller_forward.1}
  #allocation0 [shape = 'u32[]', space=smem, size = 0x4, offset = 0x4, fixed_abs, tag = 'smem constant byte address 0x4 - core index']
  #allocation1 [shape = 'u32[144,128]{1,0:T(1,128)}', space=vmem, size = 0x12000, scoped, tag = 'internal scratch']
  %s0 = inlined_call_operand.hbm [shape: f32[2,9], index: 0, kind: input, shape index: {}]
  %s1 = inlined_call_operand.hbm [shape: f32[2,30], index: 1, kind: input, shape index: {}]
  %s2 = inlined_call_operand.hbm [shape: f32[2,3], index: 2, kind: input, shape index: {}]
  %s3 = inlined_call_operand.hbm [shape: f32[9,256], index: 3, kind: input, shape index: {}]
  %s4 = inlined_call_operand.hbm [shape: f32[30,256], index: 4, kind: input, shape index: {}]
  %s5 = inlined_call_operand.vmem [shape: f32[3,256], index: 5, kind: input, shape index: {}]
  %s6 = inlined_call_operand.hbm [shape: f32[256,512], index: 6, kind: input, shape index: {}]
  %s7 = inlined_call_operand.hbm [shape: f32[256,128], index: 7, kind: input, shape index: {}]
  %s8 = inlined_call_operand.vmem [shape: f32[1,1152], index: 8, kind: input, shape index: {}]
  %s9 = inlined_call_operand.hbm [shape: f32[2,128], index: 9, kind: output, shape index: {}]
  %s10 = sld [smem:[#allocation0]]
  $region74: #{neural_ode_controller_forward.1} parent=0
    _
  %s12 = ssub.s32 1, %s10
  %s13 = scalar_select 0, %s12, %s10
  $region1: #{neural_ode_controller_forward.1} parent=0
    #allocation2 [shape = 'u8[1024]{0}', space=vmem, size = 0x400, scoped, tag = 'input window, operand 0, single buffered']
    #allocation3 [shape = 's32[1]{0}', space=sflag, size = 0x4, scoped, tag = 'scoped memory for neural_ode_controller_forward.1']
    #allocation4 [shape = 's32[1]{0}', space=sflag, size = 0x4, scoped, tag = 'scoped memory for neural_ode_controller_forward.1']
    #allocation5 [shape = 'u8[1024]{0}', space=vmem, size = 0x400, scoped, tag = 'input window, operand 1, single buffered']
    #allocation6 [shape = 's32[1]{0}', space=sflag, size = 0x4, scoped, tag = 'scoped memory for neural_ode_controller_forward.1']
    #allocation7 [shape = 'u8[1024]{0}', space=vmem, size = 0x400, scoped, tag = 'input window, operand 2, single buffered']
    #allocation8 [shape = 'u8[16384]{0}', space=vmem, size = 0x4000, scoped, tag = 'input window, operand 3, single buffered']
    #allocation9 [shape = 's32[1]{0}', space=sflag, size = 0x4, scoped, tag = 'scoped memory for neural_ode_controller_forward.1']
    #allocation10 [shape = 'u8[32768]{0}', space=vmem, size = 0x8000, scoped, tag = 'input window, operand 4, single buffered']
    #allocation11 [shape = 'u8[524288]{0}', space=vmem, size = 0x80000, scoped, tag = 'input window, operand 6, single buffered']
    #allocation12 [shape = 's32[1]{0}', space=sflag, size = 0x4, scoped, tag = 'scoped memory for neural_ode_controller_forward.1']
    #allocation13 [shape = 'u8[131072]{0}', space=vmem, size = 0x20000, scoped, tag = 'input window, operand 7, single buffered']
    #allocation14 [shape = 'u8[1024]{0}', space=vmem, size = 0x400, scoped, tag = 'output window, operand 0, single buffered']
    %14 = vsyncpa [#allocation3], 0
    %15 = vsyncpa [#allocation6], 0
    %16 = vsyncpa [#allocation9], 0
    %17 = vsyncpa [#allocation12], 0
    %18 = vsyncpa [#allocation4], 0
    // Predicated region
    $region2: #{neural_ode_controller_forward.1} parent=1 // pred_check
      _
    $region3: #{neural_ode_controller_forward.1} parent=1 // pred_check_branch
      %20 = sbr.rel (0) target = $region5
    $region4: #{neural_ode_controller_forward.1} parent=1 // pred_region
      %s22 = ssub.s32 32, 32
      %23 = vsyncadd [#allocation3], %s22
      %s25 = sshll.u32 [#allocation2], 4
      %s26 = int_to_ptr.vmem [resolvable:$true] %s25
      %28 = dma.hbm_to_vmem [thread:$0]  %s0, 32, %s26, [#allocation3]
    $region5: #{neural_ode_controller_forward.1} parent=1 // pred_fallthru
      _
    // Predicated region
    $region6: #{neural_ode_controller_forward.1} parent=1 // pred_check
      _
    $region7: #{neural_ode_controller_forward.1} parent=1 // pred_check_branch
      %30 = sbr.rel (0) target = $region9
    $region8: #{neural_ode_controller_forward.1} parent=1 // pred_region
      %s32 = ssub.s32 32, 32
      %33 = vsyncadd [#allocation6], %s32
      %s35 = sshll.u32 [#allocation5], 4
      %s36 = int_to_ptr.vmem [resolvable:$true] %s35
      %38 = dma.hbm_to_vmem [thread:$0]  %s1, 32, %s36, [#allocation6]
    $region9: #{neural_ode_controller_forward.1} parent=1 // pred_fallthru
      _
    // Predicated region
    $region10: #{neural_ode_controller_forward.1} parent=1 // pred_check
      _
    $region11: #{neural_ode_controller_forward.1} parent=1 // pred_check_branch
      %40 = sbr.rel (0) target = $region13
    $region12: #{neural_ode_controller_forward.1} parent=1 // pred_region
      %s42 = ssub.s32 32, 32
      %43 = vsyncadd [#allocation6], %s42
      %s45 = sshll.u32 [#allocation7], 4
      %s46 = int_to_ptr.vmem [resolvable:$true] %s45
      %48 = dma.hbm_to_vmem [thread:$0]  %s2, 32, %s46, [#allocation6]
    $region13: #{neural_ode_controller_forward.1} parent=1 // pred_fallthru
      _
    // Predicated region
    $region14: #{neural_ode_controller_forward.1} parent=1 // pred_check
      _
    $region15: #{neural_ode_controller_forward.1} parent=1 // pred_check_branch
      %50 = sbr.rel (0) target = $region17
    $region16: #{neural_ode_controller_forward.1} parent=1 // pred_region
      %s52 = ssub.s32 512, 512
      %53 = vsyncadd [#allocation9], %s52
      %s54 = sshll.u32 [#allocation8], 4
      %s55 = int_to_ptr.vmem [resolvable:$true] %s54
      %60 = dma.hbm_to_vmem [thread:$0]  %s3, 512, %s55, [#allocation9], 256, 256, 16
    $region17: #{neural_ode_controller_forward.1} parent=1 // pred_fallthru
      _
    // Predicated region
    $region18: #{neural_ode_controller_forward.1} parent=1 // pred_check
      _
    $region19: #{neural_ode_controller_forward.1} parent=1 // pred_check_branch
      %62 = sbr.rel (0) target = $region21
    $region20: #{neural_ode_controller_forward.1} parent=1 // pred_region
      %s64 = ssub.s32 1024, 1024
      %65 = vsyncadd [#allocation9], %s64
      %s66 = sshll.u32 [#allocation10], 4
      %s67 = int_to_ptr.vmem [resolvable:$true] %s66
      %72 = dma.hbm_to_vmem [thread:$0]  %s4, 1024, %s67, [#allocation9], 256, 256, 16
    $region21: #{neural_ode_controller_forward.1} parent=1 // pred_fallthru
      _
    // Predicated region
    $region22: #{neural_ode_controller_forward.1} parent=1 // pred_check
      _
    $region23: #{neural_ode_controller_forward.1} parent=1 // pred_check_branch
      %74 = sbr.rel (0) target = $region25
    $region24: #{neural_ode_controller_forward.1} parent=1 // pred_region
      _
    $region25: #{neural_ode_controller_forward.1} parent=1 // pred_fallthru
      _
    // Predicated region
    $region26: #{neural_ode_controller_forward.1} parent=1 // pred_check
      _
    $region27: #{neural_ode_controller_forward.1} parent=1 // pred_check_branch
      %76 = sbr.rel (0) target = $region29
    $region28: #{neural_ode_controller_forward.1} parent=1 // pred_region
      %s78 = ssub.s32 16384, 16384
      %79 = vsyncadd [#allocation12], %s78
      %s80 = sshll.u32 [#allocation11], 4
      %s81 = int_to_ptr.vmem [resolvable:$true] %s80
      %86 = dma.hbm_to_vmem [thread:$0]  %s6, 16384, %s81, [#allocation12], 512, 512, 32
    $region29: #{neural_ode_controller_forward.1} parent=1 // pred_fallthru
      _
    // Predicated region
    $region30: #{neural_ode_controller_forward.1} parent=1 // pred_check
      _
    $region31: #{neural_ode_controller_forward.1} parent=1 // pred_check_branch
      %88 = sbr.rel (0) target = $region33
    $region32: #{neural_ode_controller_forward.1} parent=1 // pred_region
      %s90 = ssub.s32 4096, 4096
      %91 = vsyncadd [#allocation12], %s90
      %s92 = sshll.u32 [#allocation13], 4
      %s93 = int_to_ptr.vmem [resolvable:$true] %s92
      %98 = dma.hbm_to_vmem [thread:$0]  %s7, 4096, %s93, [#allocation12], 128, 128, 8
    $region33: #{neural_ode_controller_forward.1} parent=1 // pred_fallthru
      _
    // Predicated region
    $region34: #{neural_ode_controller_forward.1} parent=1 // pred_check
      _
    $region35: #{neural_ode_controller_forward.1} parent=1 // pred_check_branch
      %100 = sbr.rel (0) target = $region37
    $region36: #{neural_ode_controller_forward.1} parent=1 // pred_region
      _
    $region37: #{neural_ode_controller_forward.1} parent=1 // pred_fallthru
      _
    // Predicated region
    $region38: #{neural_ode_controller_forward.1} parent=1 // pred_check
      _
    $region39: #{neural_ode_controller_forward.1} parent=1 // pred_check_branch
      %102 = sbr.rel (0) target = $region41
    $region40: #{neural_ode_controller_forward.1} parent=1 // pred_region
      %103 = dma.done [#allocation3], 32
    $region41: #{neural_ode_controller_forward.1} parent=1 // pred_fallthru
      _
    // Predicated region
    $region42: #{neural_ode_controller_forward.1} parent=1 // pred_check
      _
    $region43: #{neural_ode_controller_forward.1} parent=1 // pred_check_branch
      %105 = sbr.rel (0) target = $region45
    $region44: #{neural_ode_controller_forward.1} parent=1 // pred_region
      %106 = dma.done [#allocation6], 32
    $region45: #{neural_ode_controller_forward.1} parent=1 // pred_fallthru
      _
    // Predicated region
    $region46: #{neural_ode_controller_forward.1} parent=1 // pred_check
      _
    $region47: #{neural_ode_controller_forward.1} parent=1 // pred_check_branch
      %108 = sbr.rel (0) target = $region49
    $region48: #{neural_ode_controller_forward.1} parent=1 // pred_region
      %109 = dma.done [#allocation6], 32
    $region49: #{neural_ode_controller_forward.1} parent=1 // pred_fallthru
      _
    // Predicated region
    $region50: #{neural_ode_controller_forward.1} parent=1 // pred_check
      _
    $region51: #{neural_ode_controller_forward.1} parent=1 // pred_check_branch
      %111 = sbr.rel (0) target = $region53
    $region52: #{neural_ode_controller_forward.1} parent=1 // pred_region
      %112 = dma.done [#allocation9], 512
    $region53: #{neural_ode_controller_forward.1} parent=1 // pred_fallthru
      _
    // Predicated region
    $region54: #{neural_ode_controller_forward.1} parent=1 // pred_check
      _
    $region55: #{neural_ode_controller_forward.1} parent=1 // pred_check_branch
      %114 = sbr.rel (0) target = $region57
    $region56: #{neural_ode_controller_forward.1} parent=1 // pred_region
      %115 = dma.done [#allocation9], 1024
    $region57: #{neural_ode_controller_forward.1} parent=1 // pred_fallthru
      _
    // Predicated region
    $region58: #{neural_ode_controller_forward.1} parent=1 // pred_check
      _
    $region59: #{neural_ode_controller_forward.1} parent=1 // pred_check_branch
      %117 = sbr.rel (0) target = $region61
    $region60: #{neural_ode_controller_forward.1} parent=1 // pred_region
      %118 = dma.done [#allocation12], 16384
    $region61: #{neural_ode_controller_forward.1} parent=1 // pred_fallthru
      _
    // Predicated region
    $region62: #{neural_ode_controller_forward.1} parent=1 // pred_check
      _
    $region63: #{neural_ode_controller_forward.1} parent=1 // pred_check_branch
      %120 = sbr.rel (0) target = $region65
    $region64: #{neural_ode_controller_forward.1} parent=1 // pred_region
      %121 = dma.done [#allocation12], 4096
    $region65: #{neural_ode_controller_forward.1} parent=1 // pred_fallthru
      _
    %v122 = vld [vmem:[%s8] sm:$0x3]
    %v123 = vld [vmem:[%s8 + $0x2] sm:$0x3]
    %v124 = vld [vmem:[%s8 + $0x4] sm:$0x3]
    %v125 = vld [vmem:[%s8 + $0x6] sm:$0x1]
    %v126 = vld [vmem:[%s8 + $0x7] sm:$0x1]
    %v127 = vld [vmem:[%s8 + $0x8] sm:$0x1]
    %v128 = vld [vmem:[#allocation2] sm:$0x3]
    %v129 = vld [vmem:[#allocation8] sm:$0xff]
    %v130 = vld [vmem:[#allocation8 + $0x8] sm:$0xff]
    %v131 = vld [vmem:[#allocation8 + $0x10] sm:$0x1]
    %v132 = vld [vmem:[#allocation8 + $0x18] sm:$0x1]
    %v133 = vld [vmem:[#allocation5] sm:$0x3]
    %v134 = vld [vmem:[#allocation10] sm:$0xff]
    %v135 = vld [vmem:[#allocation10 + $0x8] sm:$0xff]
    %v136 = vld [vmem:[#allocation10 + $0x10] sm:$0xff]
    %v137 = vld [vmem:[#allocation10 + $0x18] sm:$0xff]
    %v138 = vld [vmem:[#allocation10 + $0x20] sm:$0xff]
    %v139 = vld [vmem:[#allocation10 + $0x28] sm:$0xff]
    %v140 = vld [vmem:[#allocation10 + $0x30] sm:$0x3f]
    %v141 = vld [vmem:[#allocation10 + $0x38] sm:$0x3f]
    %vm142 = vcmask 244736
    %v144 = vsel %vm142, %v133, 0
    %vm146 = vcmask 1045504
    %v148 = vsel %vm146, %v140, 0
    %v151 = vsel %vm146, %v141, 0
    %153 = vmatprep.subr.mxu0 %v135
    %154 = vmatpush1.msra.mxu0 %v134
    %155 = vmatprep.subr.mxu0 %v137
    %156 = vmatpush1.msra.mxu0 %v136
    %157 = vmatprep.subr.mxu0 %v139
    %158 = vmatpush1.msra.mxu0 %v138
    %159 = vmatprep.subr.mxu0 %v151
    %160 = vmatpush1.msra.mxu0 %v148
    %161 = vmatprep.subr.mxu0 0.0
    %162 = vmatpush1.msra.mxu0 0.0
    %163 = vmatprep.subr.mxu0 0.0
    %164 = vmatpush1.msra.mxu0 0.0
    %165 = vmatprep.subr.mxu0 0.0
    %166 = vmatpush1.msra.mxu0 0.0
    %167 = vmatprep.subr.mxu0 0.0
    %168 = vmatpush1.msra.mxu0 0.0
    %169 = vmatprep.subr.mxu0 0.0
    %170 = vmatpush1.msra.mxu0 0.0
    %171 = vmatprep.subr.mxu0 0.0
    %172 = vmatpush1.msra.mxu0 0.0
    %173 = vmatprep.subr.mxu0 0.0
    %174 = vmatpush1.msra.mxu0 0.0
    %175 = vmatprep.subr.mxu0 0.0
    %176 = vmatpush1.msra.mxu0 0.0
    %177 = vmatprep.subr.mxu0 0.0
    %178 = vmatpush1.msra.mxu0 0.0
    %179 = vmatprep.subr.mxu0 0.0
    %180 = vmatpush1.msra.mxu0 0.0
    %181 = vmatprep.subr.mxu0 0.0
    %182 = vmatpush1.msra.mxu0 0.0
    %183 = vmatprep.subr.mxu0 0.0
    %184 = vmatpush1.msra.mxu0 0.0
    %185 = vmatprep.subr.mxu0 0.0
    %186 = vmatpush1.msra.mxu0 0.0
    %187 = vmatprep.subr.mxu0 0.0
    %188 = vmatpush1.msra.mxu0 0.0
    %189 = vmatprep.subr.mxu0 0.0
    %190 = vmatpush1.msra.mxu0 0.0
    %191 = vmatprep.subr.mxu0 0.0
    %192 = vmatpush1.msra.mxu0 0.0
    %193 = vmatprep.subr.mxu0 0.0
    %194 = vmatpush1.msra.mxu0 0.0
    %195 = vmatprep.subr.mxu0 0.0
    %196 = vmatpush1.msra.mxu0 0.0
    %197 = vmatprep.subr.mxu0 0.0
    %198 = vmatpush1.msra.mxu0 0.0
    %199 = vmatprep.subr.mxu0 0.0
    %200 = vmatpush1.msra.mxu0 0.0
    %201 = vmatprep.subr.mxu0 0.0
    %202 = vmatpush1.msra.mxu0 0.0
    %203 = vmatprep.subr.mxu0 0.0
    %204 = vmatpush1.msra.mxu0 0.0
    %205 = vmatprep.subr.mxu0 0.0
    %206 = vmatpush1.msra.mxu0 0.0
    %207 = vmatprep.subr.mxu0 0.0
    %208 = vmatpush1.msra.mxu0 0.0
    %209 = vmatprep.subr.mxu0 0.0
    %210 = vmatpush1.msra.mxu0 0.0
    %211 = vmatprep.subr.mxu0 0.0
    %212 = vmatpush1.msra.mxu0 0.0
    %213 = vmatprep.subr.mxu0 0.0
    %214 = vmatpush1.msra.mxu0 0.0
    %215 = vmatprep.subr.mxu0 0.0
    %216 = vmatpush1.msra.mxu0 0.0
    %217 = vmatprep.mubr.f32.mxu0 0.0
    %218 = vmatmul.mubr.f32.gmra.mrb[0].mxu0 %v144
    %v219 = vpop.f32.mrb[0].mxu0
    %v220 = vadd.f32 0.0, %v219
    %v221 = vpop.f32.mrb[0].mxu0
    %v222 = vadd.f32 0.0, %v221
    %223 = vdwg.mxu0
    %vm224 = vcmask 72704
    %v226 = vsel %vm224, %v128, 0
    %vm228 = vcmask 1040384
    %v230 = vsel %vm228, %v131, 0
    %v233 = vsel %vm228, %v132, 0
    %235 = vmatprep.subr.mxu0 %v130
    %236 = vmatpush1.msra.mxu0 %v129
    %237 = vmatprep.subr.mxu0 %v233
    %238 = vmatpush1.msra.mxu0 %v230
    %239 = vmatprep.subr.mxu0 0.0
    %240 = vmatpush1.msra.mxu0 0.0
    %241 = vmatprep.subr.mxu0 0.0
    %242 = vmatpush1.msra.mxu0 0.0
    %243 = vmatprep.subr.mxu0 0.0
    %244 = vmatpush1.msra.mxu0 0.0
    %245 = vmatprep.subr.mxu0 0.0
    %246 = vmatpush1.msra.mxu0 0.0
    %247 = vmatprep.subr.mxu0 0.0
    %248 = vmatpush1.msra.mxu0 0.0
    %249 = vmatprep.subr.mxu0 0.0
    %250 = vmatpush1.msra.mxu0 0.0
    %251 = vmatprep.subr.mxu0 0.0
    %252 = vmatpush1.msra.mxu0 0.0
    %253 = vmatprep.subr.mxu0 0.0
    %254 = vmatpush1.msra.mxu0 0.0
    %255 = vmatprep.subr.mxu0 0.0
    %256 = vmatpush1.msra.mxu0 0.0
    %257 = vmatprep.subr.mxu0 0.0
    %258 = vmatpush1.msra.mxu0 0.0
    %259 = vmatprep.subr.mxu0 0.0
    %260 = vmatpush1.msra.mxu0 0.0
    %261 = vmatprep.subr.mxu0 0.0
    %262 = vmatpush1.msra.mxu0 0.0
    %263 = vmatprep.subr.mxu0 0.0
    %264 = vmatpush1.msra.mxu0 0.0
    %265 = vmatprep.subr.mxu0 0.0
    %266 = vmatpush1.msra.mxu0 0.0
    %267 = vmatprep.subr.mxu0 0.0
    %268 = vmatpush1.msra.mxu0 0.0
    %269 = vmatprep.subr.mxu0 0.0
    %270 = vmatpush1.msra.mxu0 0.0
    %271 = vmatprep.subr.mxu0 0.0
    %272 = vmatpush1.msra.mxu0 0.0
    %273 = vmatprep.subr.mxu0 0.0
    %274 = vmatpush1.msra.mxu0 0.0
    %275 = vmatprep.subr.mxu0 0.0
    %276 = vmatpush1.msra.mxu0 0.0
    %277 = vmatprep.subr.mxu0 0.0
    %278 = vmatpush1.msra.mxu0 0.0
    %279 = vmatprep.subr.mxu0 0.0
    %280 = vmatpush1.msra.mxu0 0.0
    %281 = vmatprep.subr.mxu0 0.0
    %282 = vmatpush1.msra.mxu0 0.0
    %283 = vmatprep.subr.mxu0 0.0
    %284 = vmatpush1.msra.mxu0 0.0
    %285 = vmatprep.subr.mxu0 0.0
    %286 = vmatpush1.msra.mxu0 0.0
    %287 = vmatprep.subr.mxu0 0.0
    %288 = vmatpush1.msra.mxu0 0.0
    %289 = vmatprep.subr.mxu0 0.0
    %290 = vmatpush1.msra.mxu0 0.0
    %291 = vmatprep.subr.mxu0 0.0
    %292 = vmatpush1.msra.mxu0 0.0
    %293 = vmatprep.subr.mxu0 0.0
    %294 = vmatpush1.msra.mxu0 0.0
    %295 = vmatprep.subr.mxu0 0.0
    %296 = vmatpush1.msra.mxu0 0.0
    %297 = vmatprep.subr.mxu0 0.0
    %298 = vmatpush1.msra.mxu0 0.0
    %299 = vmatprep.mubr.f32.mxu0 0.0
    %300 = vmatmul.mubr.f32.gmra.mrb[0].mxu0 %v226
    %v301 = vpop.f32.mrb[0].mxu0
    %v302 = vadd.f32 %v220, %v301
    %v303 = vpop.f32.mrb[0].mxu0
    %v304 = vadd.f32 %v222, %v303
    %305 = vdwg.mxu0
    %v306 = vld [vmem:[#allocation7] sm:$0x3]
    %v307 = vld [vmem:[%s5] sm:$0x77]
    %v309 = vcombine.high %v307, %v307
    %vm310 = vcmask 23552
    %v312 = vsel %vm310, %v306, 0
    %vm314 = vcmask 1042432
    %v315 = vsel %vm314, %v307, 0
    %v317 = vsel %vm314, %v309, 0
    %319 = vmatprep.subr.mxu0 %v317
    %320 = vmatpush1.msra.mxu0 %v315
    %321 = vmatprep.subr.mxu0 0.0
    %322 = vmatpush1.msra.mxu0 0.0
    %323 = vmatprep.subr.mxu0 0.0
    %324 = vmatpush1.msra.mxu0 0.0
    %325 = vmatprep.subr.mxu0 0.0
    %326 = vmatpush1.msra.mxu0 0.0
    %327 = vmatprep.subr.mxu0 0.0
    %328 = vmatpush1.msra.mxu0 0.0
    %329 = vmatprep.subr.mxu0 0.0
    %330 = vmatpush1.msra.mxu0 0.0
    %331 = vmatprep.subr.mxu0 0.0
    %332 = vmatpush1.msra.mxu0 0.0
    %333 = vmatprep.subr.mxu0 0.0
    %334 = vmatpush1.msra.mxu0 0.0
    %335 = vmatprep.subr.mxu0 0.0
    %336 = vmatpush1.msra.mxu0 0.0
    %337 = vmatprep.subr.mxu0 0.0
    %338 = vmatpush1.msra.mxu0 0.0
    %339 = vmatprep.subr.mxu0 0.0
    %340 = vmatpush1.msra.mxu0 0.0
    %341 = vmatprep.subr.mxu0 0.0
    %342 = vmatpush1.msra.mxu0 0.0
    %343 = vmatprep.subr.mxu0 0.0
    %344 = vmatpush1.msra.mxu0 0.0
    %345 = vmatprep.subr.mxu0 0.0
    %346 = vmatpush1.msra.mxu0 0.0
    %347 = vmatprep.subr.mxu0 0.0
    %348 = vmatpush1.msra.mxu0 0.0
    %349 = vmatprep.subr.mxu0 0.0
    %350 = vmatpush1.msra.mxu0 0.0
    %351 = vmatprep.subr.mxu0 0.0
    %352 = vmatpush1.msra.mxu0 0.0
    %353 = vmatprep.subr.mxu0 0.0
    %354 = vmatpush1.msra.mxu0 0.0
    %355 = vmatprep.subr.mxu0 0.0
    %356 = vmatpush1.msra.mxu0 0.0
    %357 = vmatprep.subr.mxu0 0.0
    %358 = vmatpush1.msra.mxu0 0.0
    %359 = vmatprep.subr.mxu0 0.0
    %360 = vmatpush1.msra.mxu0 0.0
    %361 = vmatprep.subr.mxu0 0.0
    %362 = vmatpush1.msra.mxu0 0.0
    %363 = vmatprep.subr.mxu0 0.0
    %364 = vmatpush1.msra.mxu0 0.0
    %365 = vmatprep.subr.mxu0 0.0
    %366 = vmatpush1.msra.mxu0 0.0
    %367 = vmatprep.subr.mxu0 0.0
    %368 = vmatpush1.msra.mxu0 0.0
    %369 = vmatprep.subr.mxu0 0.0
    %370 = vmatpush1.msra.mxu0 0.0
    %371 = vmatprep.subr.mxu0 0.0
    %372 = vmatpush1.msra.mxu0 0.0
    %373 = vmatprep.subr.mxu0 0.0
    %374 = vmatpush1.msra.mxu0 0.0
    %375 = vmatprep.subr.mxu0 0.0
    %376 = vmatpush1.msra.mxu0 0.0
    %377 = vmatprep.subr.mxu0 0.0
    %378 = vmatpush1.msra.mxu0 0.0
    %379 = vmatprep.subr.mxu0 0.0
    %380 = vmatpush1.msra.mxu0 0.0
    %381 = vmatprep.subr.mxu0 0.0
    %382 = vmatpush1.msra.mxu0 0.0
    %383 = vmatprep.mubr.f32.mxu0 0.0
    %384 = vmatmul.mubr.f32.gmra.mrb[0].mxu0 %v312
    %v385 = vpop.f32.mrb[0].mxu0
    %v386 = vadd.f32 0.0, %v385
    %v387 = vpop.f32.mrb[0].mxu0
    %v388 = vadd.f32 0.0, %v387
    %389 = vdwg.mxu0
    %v390 = vadd.f32 %v302, %v386
    %v391 = vadd.f32 %v304, %v388
    %v393 = vlaneseq
    %v394 = vshrl.u32 %v393, 7
    %v395 = vsub.s32 0, %v394
    %v396 = vrot.slane %v122, %v395
    %v397 = vlaneseq
    %v398 = vshrl.u32 %v397, 7
    %v399 = vsub.s32 1, %v398
    %v400 = vrot.slane %v122, %v399
    %v403 = vadd.f32 %v390, %v396
    %v404 = vadd.f32 %v391, %v400
    %v405 = vmul.f32 %v403, 0.01
    %v406 = vmul.f32 %v404, 0.01
    %v407 = vmax.f32 %v403, %v405
    %v408 = vmax.f32 %v404, %v406
    %v409 = vld [vmem:[#allocation11] sm:$0xff]
    %v410 = vld [vmem:[#allocation11 + $0x8] sm:$0xff]
    %v411 = vld [vmem:[#allocation11 + $0x20] sm:$0xff]
    %v412 = vld [vmem:[#allocation11 + $0x28] sm:$0xff]
    %v413 = vld [vmem:[#allocation11 + $0x40] sm:$0xff]
    %v414 = vld [vmem:[#allocation11 + $0x48] sm:$0xff]
    %v415 = vld [vmem:[#allocation11 + $0x60] sm:$0xff]
    %v416 = vld [vmem:[#allocation11 + $0x68] sm:$0xff]
    %v417 = vld [vmem:[#allocation11 + $0x80] sm:$0xff]
    %v418 = vld [vmem:[#allocation11 + $0x88] sm:$0xff]
    %v419 = vld [vmem:[#allocation11 + $0xa0] sm:$0xff]
    %v420 = vld [vmem:[#allocation11 + $0xa8] sm:$0xff]
    %v421 = vld [vmem:[#allocation11 + $0xc0] sm:$0xff]
    %v422 = vld [vmem:[#allocation11 + $0xc8] sm:$0xff]
    %v423 = vld [vmem:[#allocation11 + $0xe0] sm:$0xff]
    %v424 = vld [vmem:[#allocation11 + $0xe8] sm:$0xff]
    %v425 = vld [vmem:[#allocation11 + $0x100] sm:$0xff]
    %v426 = vld [vmem:[#allocation11 + $0x108] sm:$0xff]
    %v427 = vld [vmem:[#allocation11 + $0x120] sm:$0xff]
    %v428 = vld [vmem:[#allocation11 + $0x128] sm:$0xff]
    %v429 = vld [vmem:[#allocation11 + $0x140] sm:$0xff]
    %v430 = vld [vmem:[#allocation11 + $0x148] sm:$0xff]
    %v431 = vld [vmem:[#allocation11 + $0x160] sm:$0xff]
    %v432 = vld [vmem:[#allocation11 + $0x168] sm:$0xff]
    %v433 = vld [vmem:[#allocation11 + $0x180] sm:$0xff]
    %v434 = vld [vmem:[#allocation11 + $0x188] sm:$0xff]
    %v435 = vld [vmem:[#allocation11 + $0x1a0] sm:$0xff]
    %v436 = vld [vmem:[#allocation11 + $0x1a8] sm:$0xff]
    %v437 = vld [vmem:[#allocation11 + $0x1c0] sm:$0xff]
    %v438 = vld [vmem:[#allocation11 + $0x1c8] sm:$0xff]
    %v439 = vld [vmem:[#allocation11 + $0x1e0] sm:$0xff]
    %v440 = vld [vmem:[#allocation11 + $0x1e8] sm:$0xff]
    %v441 = vld [vmem:[#allocation11 + $0x200] sm:$0xff]
    %v442 = vld [vmem:[#allocation11 + $0x208] sm:$0xff]
    %v443 = vld [vmem:[#allocation11 + $0x220] sm:$0xff]
    %v444 = vld [vmem:[#allocation11 + $0x228] sm:$0xff]
    %v445 = vld [vmem:[#allocation11 + $0x240] sm:$0xff]
    %v446 = vld [vmem:[#allocation11 + $0x248] sm:$0xff]
    %v447 = vld [vmem:[#allocation11 + $0x260] sm:$0xff]
    %v448 = vld [vmem:[#allocation11 + $0x268] sm:$0xff]
    %v449 = vld [vmem:[#allocation11 + $0x280] sm:$0xff]
    %v450 = vld [vmem:[#allocation11 + $0x288] sm:$0xff]
    %v451 = vld [vmem:[#allocation11 + $0x2a0] sm:$0xff]
    %v452 = vld [vmem:[#allocation11 + $0x2a8] sm:$0xff]
    %v453 = vld [vmem:[#allocation11 + $0x2c0] sm:$0xff]
    %v454 = vld [vmem:[#allocation11 + $0x2c8] sm:$0xff]
    %v455 = vld [vmem:[#allocation11 + $0x2e0] sm:$0xff]
    %v456 = vld [vmem:[#allocation11 + $0x2e8] sm:$0xff]
    %v457 = vld [vmem:[#allocation11 + $0x300] sm:$0xff]
    %v458 = vld [vmem:[#allocation11 + $0x308] sm:$0xff]
    %v459 = vld [vmem:[#allocation11 + $0x320] sm:$0xff]
    %v460 = vld [vmem:[#allocation11 + $0x328] sm:$0xff]
    %v461 = vld [vmem:[#allocation11 + $0x340] sm:$0xff]
    %v462 = vld [vmem:[#allocation11 + $0x348] sm:$0xff]
    %v463 = vld [vmem:[#allocation11 + $0x360] sm:$0xff]
    %v464 = vld [vmem:[#allocation11 + $0x368] sm:$0xff]
    %v465 = vld [vmem:[#allocation11 + $0x380] sm:$0xff]
    %v466 = vld [vmem:[#allocation11 + $0x388] sm:$0xff]
    %v467 = vld [vmem:[#allocation11 + $0x3a0] sm:$0xff]
    %v468 = vld [vmem:[#allocation11 + $0x3a8] sm:$0xff]
    %v469 = vld [vmem:[#allocation11 + $0x3c0] sm:$0xff]
    %v470 = vld [vmem:[#allocation11 + $0x3c8] sm:$0xff]
    %v471 = vld [vmem:[#allocation11 + $0x3e0] sm:$0xff]
    %v472 = vld [vmem:[#allocation11 + $0x3e8] sm:$0xff]
    %v474 = vlaneseq
    %v475 = vshrl.u32 %v474, 7
    %v476 = vsub.s32 0, %v475
    %v477 = vrot.slane %v123, %v476
    %v478 = vlaneseq
    %v479 = vshrl.u32 %v478, 7
    %v480 = vsub.s32 1, %v479
    %v481 = vrot.slane %v123, %v480
    %484 = vmatprep.subr.mxu0 %v410
    %485 = vmatpush1.msra.mxu0 %v409
    %486 = vmatprep.subr.mxu0 %v412
    %487 = vmatpush1.msra.mxu0 %v411
    %488 = vmatprep.subr.mxu0 %v414
    %489 = vmatpush1.msra.mxu0 %v413
    %490 = vmatprep.subr.mxu0 %v416
    %491 = vmatpush1.msra.mxu0 %v415
    %492 = vmatprep.subr.mxu0 %v418
    %493 = vmatpush1.msra.mxu0 %v417
    %494 = vmatprep.subr.mxu0 %v420
    %495 = vmatpush1.msra.mxu0 %v419
    %496 = vmatprep.subr.mxu0 %v422
    %497 = vmatpush1.msra.mxu0 %v421
    %498 = vmatprep.subr.mxu0 %v424
    %499 = vmatpush1.msra.mxu0 %v423
    %500 = vmatprep.subr.mxu0 %v426
    %501 = vmatpush1.msra.mxu0 %v425
    %502 = vmatprep.subr.mxu0 %v428
    %503 = vmatpush1.msra.mxu0 %v427
    %504 = vmatprep.subr.mxu0 %v430
    %505 = vmatpush1.msra.mxu0 %v429
    %506 = vmatprep.subr.mxu0 %v432
    %507 = vmatpush1.msra.mxu0 %v431
    %508 = vmatprep.subr.mxu0 %v434
    %509 = vmatpush1.msra.mxu0 %v433
    %510 = vmatprep.subr.mxu0 %v436
    %511 = vmatpush1.msra.mxu0 %v435
    %512 = vmatprep.subr.mxu0 %v438
    %513 = vmatpush1.msra.mxu0 %v437
    %514 = vmatprep.subr.mxu0 %v440
    %515 = vmatpush1.msra.mxu0 %v439
    %516 = vmatprep.subr.mxu0 %v442
    %517 = vmatpush1.msra.mxu0 %v441
    %518 = vmatprep.subr.mxu0 %v444
    %519 = vmatpush1.msra.mxu0 %v443
    %520 = vmatprep.subr.mxu0 %v446
    %521 = vmatpush1.msra.mxu0 %v445
    %522 = vmatprep.subr.mxu0 %v448
    %523 = vmatpush1.msra.mxu0 %v447
    %524 = vmatprep.subr.mxu0 %v450
    %525 = vmatpush1.msra.mxu0 %v449
    %526 = vmatprep.subr.mxu0 %v452
    %527 = vmatpush1.msra.mxu0 %v451
    %528 = vmatprep.subr.mxu0 %v454
    %529 = vmatpush1.msra.mxu0 %v453
    %530 = vmatprep.subr.mxu0 %v456
    %531 = vmatpush1.msra.mxu0 %v455
    %532 = vmatprep.subr.mxu0 %v458
    %533 = vmatpush1.msra.mxu0 %v457
    %534 = vmatprep.subr.mxu0 %v460
    %535 = vmatpush1.msra.mxu0 %v459
    %536 = vmatprep.subr.mxu0 %v462
    %537 = vmatpush1.msra.mxu0 %v461
    %538 = vmatprep.subr.mxu0 %v464
    %539 = vmatpush1.msra.mxu0 %v463
    %540 = vmatprep.subr.mxu0 %v466
    %541 = vmatpush1.msra.mxu0 %v465
    %542 = vmatprep.subr.mxu0 %v468
    %543 = vmatpush1.msra.mxu0 %v467
    %544 = vmatprep.subr.mxu0 %v470
    %545 = vmatpush1.msra.mxu0 %v469
    %546 = vmatprep.subr.mxu0 %v472
    %547 = vmatpush1.msra.mxu0 %v471
    %548 = vmatprep.mubr.f32.mxu0 %v408
    %549 = vmatmul.mubr.f32.gmra.mrb[0].mxu0 %v407
    %v550 = vpop.f32.mrb[0].mxu0
    %v551 = vadd.f32 %v477, %v550
    %v552 = vpop.f32.mrb[0].mxu0
    %v553 = vadd.f32 %v481, %v552
    %554 = vdwg.mxu0
    %v555 = vmul.f32 %v551, 0.01
    %v556 = vmul.f32 %v553, 0.01
    %v557 = vmax.f32 %v551, %v555
    %v558 = vmax.f32 %v553, %v556
    %v559 = vld [vmem:[#allocation11 + $0x10] sm:$0xff]
    %v560 = vld [vmem:[#allocation11 + $0x18] sm:$0xff]
    %v561 = vld [vmem:[#allocation11 + $0x30] sm:$0xff]
    %v562 = vld [vmem:[#allocation11 + $0x38] sm:$0xff]
    %v563 = vld [vmem:[#allocation11 + $0x50] sm:$0xff]
    %v564 = vld [vmem:[#allocation11 + $0x58] sm:$0xff]
    %v565 = vld [vmem:[#allocation11 + $0x70] sm:$0xff]
    %v566 = vld [vmem:[#allocation11 + $0x78] sm:$0xff]
    %v567 = vld [vmem:[#allocation11 + $0x90] sm:$0xff]
    %v568 = vld [vmem:[#allocation11 + $0x98] sm:$0xff]
    %v569 = vld [vmem:[#allocation11 + $0xb0] sm:$0xff]
    %v570 = vld [vmem:[#allocation11 + $0xb8] sm:$0xff]
    %v571 = vld [vmem:[#allocation11 + $0xd0] sm:$0xff]
    %v572 = vld [vmem:[#allocation11 + $0xd8] sm:$0xff]
    %v573 = vld [vmem:[#allocation11 + $0xf0] sm:$0xff]
    %v574 = vld [vmem:[#allocation11 + $0xf8] sm:$0xff]
    %v575 = vld [vmem:[#allocation11 + $0x110] sm:$0xff]
    %v576 = vld [vmem:[#allocation11 + $0x118] sm:$0xff]
    %v577 = vld [vmem:[#allocation11 + $0x130] sm:$0xff]
    %v578 = vld [vmem:[#allocation11 + $0x138] sm:$0xff]
    %v579 = vld [vmem:[#allocation11 + $0x150] sm:$0xff]
    %v580 = vld [vmem:[#allocation11 + $0x158] sm:$0xff]
    %v581 = vld [vmem:[#allocation11 + $0x170] sm:$0xff]
    %v582 = vld [vmem:[#allocation11 + $0x178] sm:$0xff]
    %v583 = vld [vmem:[#allocation11 + $0x190] sm:$0xff]
    %v584 = vld [vmem:[#allocation11 + $0x198] sm:$0xff]
    %v585 = vld [vmem:[#allocation11 + $0x1b0] sm:$0xff]
    %v586 = vld [vmem:[#allocation11 + $0x1b8] sm:$0xff]
    %v587 = vld [vmem:[#allocation11 + $0x1d0] sm:$0xff]
    %v588 = vld [vmem:[#allocation11 + $0x1d8] sm:$0xff]
    %v589 = vld [vmem:[#allocation11 + $0x1f0] sm:$0xff]
    %v590 = vld [vmem:[#allocation11 + $0x1f8] sm:$0xff]
    %v591 = vld [vmem:[#allocation11 + $0x210] sm:$0xff]
    %v592 = vld [vmem:[#allocation11 + $0x218] sm:$0xff]
    %v593 = vld [vmem:[#allocation11 + $0x230] sm:$0xff]
    %v594 = vld [vmem:[#allocation11 + $0x238] sm:$0xff]
    %v595 = vld [vmem:[#allocation11 + $0x250] sm:$0xff]
    %v596 = vld [vmem:[#allocation11 + $0x258] sm:$0xff]
    %v597 = vld [vmem:[#allocation11 + $0x270] sm:$0xff]
    %v598 = vld [vmem:[#allocation11 + $0x278] sm:$0xff]
    %v599 = vld [vmem:[#allocation11 + $0x290] sm:$0xff]
    %v600 = vld [vmem:[#allocation11 + $0x298] sm:$0xff]
    %v601 = vld [vmem:[#allocation11 + $0x2b0] sm:$0xff]
    %v602 = vld [vmem:[#allocation11 + $0x2b8] sm:$0xff]
    %v603 = vld [vmem:[#allocation11 + $0x2d0] sm:$0xff]
    %v604 = vld [vmem:[#allocation11 + $0x2d8] sm:$0xff]
    %v605 = vld [vmem:[#allocation11 + $0x2f0] sm:$0xff]
    %v606 = vld [vmem:[#allocation11 + $0x2f8] sm:$0xff]
    %v607 = vld [vmem:[#allocation11 + $0x310] sm:$0xff]
    %v608 = vld [vmem:[#allocation11 + $0x318] sm:$0xff]
    %v609 = vld [vmem:[#allocation11 + $0x330] sm:$0xff]
    %v610 = vld [vmem:[#allocation11 + $0x338] sm:$0xff]
    %v611 = vld [vmem:[#allocation11 + $0x350] sm:$0xff]
    %v612 = vld [vmem:[#allocation11 + $0x358] sm:$0xff]
    %v613 = vld [vmem:[#allocation11 + $0x370] sm:$0xff]
    %v614 = vld [vmem:[#allocation11 + $0x378] sm:$0xff]
    %v615 = vld [vmem:[#allocation11 + $0x390] sm:$0xff]
    %v616 = vld [vmem:[#allocation11 + $0x398] sm:$0xff]
    %v617 = vld [vmem:[#allocation11 + $0x3b0] sm:$0xff]
    %v618 = vld [vmem:[#allocation11 + $0x3b8] sm:$0xff]
    %v619 = vld [vmem:[#allocation11 + $0x3d0] sm:$0xff]
    %v620 = vld [vmem:[#allocation11 + $0x3d8] sm:$0xff]
    %v621 = vld [vmem:[#allocation11 + $0x3f0] sm:$0xff]
    %v622 = vld [vmem:[#allocation11 + $0x3f8] sm:$0xff]
    %v624 = vlaneseq
    %v625 = vshrl.u32 %v624, 7
    %v626 = vsub.s32 0, %v625
    %v627 = vrot.slane %v124, %v626
    %v628 = vlaneseq
    %v629 = vshrl.u32 %v628, 7
    %v630 = vsub.s32 1, %v629
    %v631 = vrot.slane %v124, %v630
    %634 = vmatprep.subr.mxu0 %v560
    %635 = vmatpush1.msra.mxu0 %v559
    %636 = vmatprep.subr.mxu0 %v562
    %637 = vmatpush1.msra.mxu0 %v561
    %638 = vmatprep.subr.mxu0 %v564
    %639 = vmatpush1.msra.mxu0 %v563
    %640 = vmatprep.subr.mxu0 %v566
    %641 = vmatpush1.msra.mxu0 %v565
    %642 = vmatprep.subr.mxu0 %v568
    %643 = vmatpush1.msra.mxu0 %v567
    %644 = vmatprep.subr.mxu0 %v570
    %645 = vmatpush1.msra.mxu0 %v569
    %646 = vmatprep.subr.mxu0 %v572
    %647 = vmatpush1.msra.mxu0 %v571
    %648 = vmatprep.subr.mxu0 %v574
    %649 = vmatpush1.msra.mxu0 %v573
    %650 = vmatprep.subr.mxu0 %v576
    %651 = vmatpush1.msra.mxu0 %v575
    %652 = vmatprep.subr.mxu0 %v578
    %653 = vmatpush1.msra.mxu0 %v577
    %654 = vmatprep.subr.mxu0 %v580
    %655 = vmatpush1.msra.mxu0 %v579
    %656 = vmatprep.subr.mxu0 %v582
    %657 = vmatpush1.msra.mxu0 %v581
    %658 = vmatprep.subr.mxu0 %v584
    %659 = vmatpush1.msra.mxu0 %v583
    %660 = vmatprep.subr.mxu0 %v586
    %661 = vmatpush1.msra.mxu0 %v585
    %662 = vmatprep.subr.mxu0 %v588
    %663 = vmatpush1.msra.mxu0 %v587
    %664 = vmatprep.subr.mxu0 %v590
    %665 = vmatpush1.msra.mxu0 %v589
    %666 = vmatprep.subr.mxu0 %v592
    %667 = vmatpush1.msra.mxu0 %v591
    %668 = vmatprep.subr.mxu0 %v594
    %669 = vmatpush1.msra.mxu0 %v593
    %670 = vmatprep.subr.mxu0 %v596
    %671 = vmatpush1.msra.mxu0 %v595
    %672 = vmatprep.subr.mxu0 %v598
    %673 = vmatpush1.msra.mxu0 %v597
    %674 = vmatprep.subr.mxu0 %v600
    %675 = vmatpush1.msra.mxu0 %v599
    %676 = vmatprep.subr.mxu0 %v602
    %677 = vmatpush1.msra.mxu0 %v601
    %678 = vmatprep.subr.mxu0 %v604
    %679 = vmatpush1.msra.mxu0 %v603
    %680 = vmatprep.subr.mxu0 %v606
    %681 = vmatpush1.msra.mxu0 %v605
    %682 = vmatprep.subr.mxu0 %v608
    %683 = vmatpush1.msra.mxu0 %v607
    %684 = vmatprep.subr.mxu0 %v610
    %685 = vmatpush1.msra.mxu0 %v609
    %686 = vmatprep.subr.mxu0 %v612
    %687 = vmatpush1.msra.mxu0 %v611
    %688 = vmatprep.subr.mxu0 %v614
    %689 = vmatpush1.msra.mxu0 %v613
    %690 = vmatprep.subr.mxu0 %v616
    %691 = vmatpush1.msra.mxu0 %v615
    %692 = vmatprep.subr.mxu0 %v618
    %693 = vmatpush1.msra.mxu0 %v617
    %694 = vmatprep.subr.mxu0 %v620
    %695 = vmatpush1.msra.mxu0 %v619
    %696 = vmatprep.subr.mxu0 %v622
    %697 = vmatpush1.msra.mxu0 %v621
    %698 = vmatprep.mubr.f32.mxu0 %v558
    %699 = vmatmul.mubr.f32.gmra.mrb[0].mxu0 %v557
    %v700 = vpop.f32.mrb[0].mxu0
    %v701 = vadd.f32 %v627, %v700
    %v702 = vpop.f32.mrb[0].mxu0
    %v703 = vadd.f32 %v631, %v702
    %704 = vdwg.mxu0
    %v705 = vmul.f32 %v701, 0.01
    %v706 = vmul.f32 %v703, 0.01
    %v707 = vmax.f32 %v701, %v705
    %v708 = vmax.f32 %v703, %v706
    %v709 = vld [vmem:[#allocation13] sm:$0xff]
    %v710 = vld [vmem:[#allocation13 + $0x8] sm:$0xff]
    %v711 = vld [vmem:[#allocation13 + $0x10] sm:$0xff]
    %v712 = vld [vmem:[#allocation13 + $0x18] sm:$0xff]
    %v713 = vld [vmem:[#allocation13 + $0x20] sm:$0xff]
    %v714 = vld [vmem:[#allocation13 + $0x28] sm:$0xff]
    %v715 = vld [vmem:[#allocation13 + $0x30] sm:$0xff]
    %v716 = vld [vmem:[#allocation13 + $0x38] sm:$0xff]
    %v717 = vld [vmem:[#allocation13 + $0x40] sm:$0xff]
    %v718 = vld [vmem:[#allocation13 + $0x48] sm:$0xff]
    %v719 = vld [vmem:[#allocation13 + $0x50] sm:$0xff]
    %v720 = vld [vmem:[#allocation13 + $0x58] sm:$0xff]
    %v721 = vld [vmem:[#allocation13 + $0x60] sm:$0xff]
    %v722 = vld [vmem:[#allocation13 + $0x68] sm:$0xff]
    %v723 = vld [vmem:[#allocation13 + $0x70] sm:$0xff]
    %v724 = vld [vmem:[#allocation13 + $0x78] sm:$0xff]
    %v725 = vld [vmem:[#allocation13 + $0x80] sm:$0xff]
    %v726 = vld [vmem:[#allocation13 + $0x88] sm:$0xff]
    %v727 = vld [vmem:[#allocation13 + $0x90] sm:$0xff]
    %v728 = vld [vmem:[#allocation13 + $0x98] sm:$0xff]
    %v729 = vld [vmem:[#allocation13 + $0xa0] sm:$0xff]
    %v730 = vld [vmem:[#allocation13 + $0xa8] sm:$0xff]
    %v731 = vld [vmem:[#allocation13 + $0xb0] sm:$0xff]
    %v732 = vld [vmem:[#allocation13 + $0xb8] sm:$0xff]
    %v733 = vld [vmem:[#allocation13 + $0xc0] sm:$0xff]
    %v734 = vld [vmem:[#allocation13 + $0xc8] sm:$0xff]
    %v735 = vld [vmem:[#allocation13 + $0xd0] sm:$0xff]
    %v736 = vld [vmem:[#allocation13 + $0xd8] sm:$0xff]
    %v737 = vld [vmem:[#allocation13 + $0xe0] sm:$0xff]
    %v738 = vld [vmem:[#allocation13 + $0xe8] sm:$0xff]
    %v739 = vld [vmem:[#allocation13 + $0xf0] sm:$0xff]
    %v740 = vld [vmem:[#allocation13 + $0xf8] sm:$0xff]
    %v742 = vlaneseq
    %v743 = vshrl.u32 %v742, 7
    %v744 = vsub.s32 0, %v743
    %v745 = vrot.slane %v125, %v744
    %747 = vmatprep.subr.mxu0 0.0
    %748 = vmatpush1.msra.mxu0 %v709
    %749 = vmatprep.subr.mxu0 0.0
    %750 = vmatpush1.msra.mxu0 %v710
    %751 = vmatprep.subr.mxu0 0.0
    %752 = vmatpush1.msra.mxu0 %v711
    %753 = vmatprep.subr.mxu0 0.0
    %754 = vmatpush1.msra.mxu0 %v712
    %755 = vmatprep.subr.mxu0 0.0
    %756 = vmatpush1.msra.mxu0 %v713
    %757 = vmatprep.subr.mxu0 0.0
    %758 = vmatpush1.msra.mxu0 %v714
    %759 = vmatprep.subr.mxu0 0.0
    %760 = vmatpush1.msra.mxu0 %v715
    %761 = vmatprep.subr.mxu0 0.0
    %762 = vmatpush1.msra.mxu0 %v716
    %763 = vmatprep.subr.mxu0 0.0
    %764 = vmatpush1.msra.mxu0 %v717
    %765 = vmatprep.subr.mxu0 0.0
    %766 = vmatpush1.msra.mxu0 %v718
    %767 = vmatprep.subr.mxu0 0.0
    %768 = vmatpush1.msra.mxu0 %v719
    %769 = vmatprep.subr.mxu0 0.0
    %770 = vmatpush1.msra.mxu0 %v720
    %771 = vmatprep.subr.mxu0 0.0
    %772 = vmatpush1.msra.mxu0 %v721
    %773 = vmatprep.subr.mxu0 0.0
    %774 = vmatpush1.msra.mxu0 %v722
    %775 = vmatprep.subr.mxu0 0.0
    %776 = vmatpush1.msra.mxu0 %v723
    %777 = vmatprep.subr.mxu0 0.0
    %778 = vmatpush1.msra.mxu0 %v724
    %779 = vmatprep.subr.mxu0 0.0
    %780 = vmatpush1.msra.mxu0 %v725
    %781 = vmatprep.subr.mxu0 0.0
    %782 = vmatpush1.msra.mxu0 %v726
    %783 = vmatprep.subr.mxu0 0.0
    %784 = vmatpush1.msra.mxu0 %v727
    %785 = vmatprep.subr.mxu0 0.0
    %786 = vmatpush1.msra.mxu0 %v728
    %787 = vmatprep.subr.mxu0 0.0
    %788 = vmatpush1.msra.mxu0 %v729
    %789 = vmatprep.subr.mxu0 0.0
    %790 = vmatpush1.msra.mxu0 %v730
    %791 = vmatprep.subr.mxu0 0.0
    %792 = vmatpush1.msra.mxu0 %v731
    %793 = vmatprep.subr.mxu0 0.0
    %794 = vmatpush1.msra.mxu0 %v732
    %795 = vmatprep.subr.mxu0 0.0
    %796 = vmatpush1.msra.mxu0 %v733
    %797 = vmatprep.subr.mxu0 0.0
    %798 = vmatpush1.msra.mxu0 %v734
    %799 = vmatprep.subr.mxu0 0.0
    %800 = vmatpush1.msra.mxu0 %v735
    %801 = vmatprep.subr.mxu0 0.0
    %802 = vmatpush1.msra.mxu0 %v736
    %803 = vmatprep.subr.mxu0 0.0
    %804 = vmatpush1.msra.mxu0 %v737
    %805 = vmatprep.subr.mxu0 0.0
    %806 = vmatpush1.msra.mxu0 %v738
    %807 = vmatprep.subr.mxu0 0.0
    %808 = vmatpush1.msra.mxu0 %v739
    %809 = vmatprep.subr.mxu0 0.0
    %810 = vmatpush1.msra.mxu0 %v740
    %811 = vmatprep.mubr.f32.mxu0 %v708
    %812 = vmatmul.mubr.f32.gmra.mrb[0].mxu0 %v707
    %v813 = vpop.f32.mrb[0].mxu0
    %v814 = vadd.f32 %v745, %v813
    %v815 = vpop.f32.mrb[0].mxu0
    %816 = vdwg.mxu0
    %v817 = vtanh.pop %v814
    %v819 = vlaneseq
    %v820 = vshrl.u32 %v819, 7
    %v821 = vsub.s32 0, %v820
    %v822 = vrot.slane %v127, %v821
    %v824 = vmul.f32 %v822, %v817
    %v826 = vlaneseq
    %v827 = vshrl.u32 %v826, 7
    %v828 = vsub.s32 0, %v827
    %v829 = vrot.slane %v126, %v828
    %v831 = vadd.f32 %v829, %v824
    %832 = vst [vmem:[#allocation14] sm:$0x3] %v831
    // Predicated region
    $region66: #{neural_ode_controller_forward.1} parent=1 // pred_check
      _
    $region67: #{neural_ode_controller_forward.1} parent=1 // pred_check_branch
      %834 = sbr.rel (0) target = $region69
    $region68: #{neural_ode_controller_forward.1} parent=1 // pred_region
      %s836 = ssub.s32 32, 32
      %837 = vsyncadd [#allocation4], %s836
      %s839 = sshll.u32 [#allocation14], 4
      %s840 = int_to_ptr.vmem [resolvable:$true] %s839
      %842 = dma.vmem_to_hbm [thread:$0]  %s840, 32, %s9, [#allocation4]
    $region69: #{neural_ode_controller_forward.1} parent=1 // pred_fallthru
      _
    // Predicated region
    $region70: #{neural_ode_controller_forward.1} parent=1 // pred_check
      _
    $region71: #{neural_ode_controller_forward.1} parent=1 // pred_check_branch
      %844 = sbr.rel (0) target = $region73
    $region72: #{neural_ode_controller_forward.1} parent=1 // pred_region
      %845 = dma.done [#allocation4], 32
    $region73: #{neural_ode_controller_forward.1} parent=1 // pred_fallthru
      _
    %846 = vsyncpa [#allocation3], 1
    %847 = vsyncpa [#allocation6], 1
    %848 = vsyncpa [#allocation9], 1
    %849 = vsyncpa [#allocation12], 1
    %850 = vsyncpa [#allocation4], 1

</llo_original>
